<compile_context>
chip_gen: v7x
topology: tpu7x:2x2x1
jax: 0.10.0
libtpu: 0.0.40
codegen_flags: <defaults>
</compile_context>

<pallas_src>
import functools

import jax
import jax.numpy as jnp
from jax.experimental import pallas as pl
from jax.experimental.pallas import tpu as pltpu

STATE_SIZE = 64
HIDDEN = 50
ACTION_SIZE = 4

# Hidden padded 50 -> 64 so both matmul blocks are clean full-dim tiles.
# Padded hidden columns of w1 / entries of b1 are zero -> those lanes carry
# exact zeros through ReLU, and the matching (zero) rows of w2 contribute 0.
HIDDEN_P = 64


def _round_up(x, m):
    return (x + m - 1) // m * m


def _choose_tile(B, block_batch, *, min_tiles=8, min_tile_rows=256):
    """Pick batch tile TB (multiple of 8 for f32 sublanes).

    Enough tiles for v7x megacore + per-core DMA pipelining when B is large,
    each tile big enough to amortize the ~0.35 us/step overhead, and TB close
    to B / n_tiles so batch padding waste stays small.
    """
    max_useful_tiles = max(pl.cdiv(B, min_tile_rows), 1)
    n_tiles = max(pl.cdiv(B, block_batch), min(min_tiles, max_useful_tiles))
    return _round_up(pl.cdiv(B, n_tiles), 8)


def qnet_kernel(x_ref, w1_ref, b1_ref, w2_ref, b2_ref, o_ref):
    # In-kernel f32 -> bf16 cast (VPU has huge slack; halves input HBM traffic
    # vs a separate host-side cast pass).
    x = x_ref[...].astype(jnp.bfloat16)
    # fc1: bf16 operands on the MXU, f32 accumulate; bias + ReLU in f32 (VPU).
    h = jnp.dot(x, w1_ref[...], preferred_element_type=jnp.float32)
    h = jnp.maximum(h + b1_ref[...], 0.0)
    # fc2: (TB, 64) @ (64, 4) -> (TB, 4); narrow-N output, writeback is tiny.
    out = jnp.dot(h.astype(jnp.bfloat16), w2_ref[...],
                  preferred_element_type=jnp.float32)
    o_ref[...] = out + b2_ref[...]


def prepare_params(w1, b1, w2, b2):
    """One-time padding + bf16 cast of the weights (do this OUTSIDE the RL step loop)."""
    w1_p = jnp.zeros((STATE_SIZE, HIDDEN_P), jnp.bfloat16).at[:, :HIDDEN].set(
        w1.astype(jnp.bfloat16))
    b1_p = jnp.zeros((1, HIDDEN_P), jnp.float32).at[0, :HIDDEN].set(
        b1.astype(jnp.float32))
    w2_p = jnp.zeros((HIDDEN_P, ACTION_SIZE), jnp.bfloat16).at[:HIDDEN, :].set(
        w2.astype(jnp.bfloat16))
    b2_p = b2.reshape(1, ACTION_SIZE).astype(jnp.float32)
    return w1_p, b1_p, w2_p, b2_p


@functools.partial(jax.jit, static_argnames=("block_batch",))
def qnetwork_forward(x, params, *, block_batch=2048):
    """x: (B, STATE_SIZE) f32; params from prepare_params(); returns (B, ACTION_SIZE) f32."""
    w1_p, b1_p, w2_p, b2_p = params
    B = x.shape[0]
    TB = _choose_tile(B, block_batch)
    B_pad = _round_up(B, TB)
    if B_pad != B:
        # Padded rows produce garbage Q-values (ReLU(b1) @ w2 + b2); they are
        # sliced off below.  Padding is at most one tile and usually < 10%.
        x = jnp.zeros((B_pad, STATE_SIZE), x.dtype).at[:B].set(x)

    n_tiles = B_pad // TB
    flops = 2 * B_pad * (STATE_SIZE * HIDDEN_P + HIDDEN_P * ACTION_SIZE)
    bytes_accessed = (
        B_pad * STATE_SIZE * 4                     # x (f32 in)
        + B_pad * ACTION_SIZE * 4                  # out (f32)
        + (STATE_SIZE * HIDDEN_P + HIDDEN_P * ACTION_SIZE) * 2  # bf16 weights
        + (HIDDEN_P + ACTION_SIZE) * 4)            # f32 biases

    out = pl.pallas_call(
        qnet_kernel,
        out_shape=jax.ShapeDtypeStruct((B_pad, ACTION_SIZE), jnp.float32),
        grid_spec=pl.GridSpec(
            grid=(n_tiles,),
            in_specs=[
                # x tiled over batch -> double-buffered HBM->VMEM prefetch.
                pl.BlockSpec((TB, STATE_SIZE), lambda i: (i, 0)),
                # Weights / biases: same block every iteration -> VMEM-resident.
                pl.BlockSpec((STATE_SIZE, HIDDEN_P), lambda i: (0, 0)),
                pl.BlockSpec((1, HIDDEN_P), lambda i: (0, 0)),
                pl.BlockSpec((HIDDEN_P, ACTION_SIZE), lambda i: (0, 0)),
                pl.BlockSpec((1, ACTION_SIZE), lambda i: (0, 0)),
            ],
            # Full last dim (ACTION_SIZE) -> each tile's writeback is one
            # contiguous TB*16 B chunk; no 128-lane padded slab, no wrapper
            # column slice.
            out_specs=pl.BlockSpec((TB, ACTION_SIZE), lambda i: (i, 0)),
        ),
        compiler_params=pltpu.CompilerParams(
            dimension_semantics=("parallel",),      # batch tiles across v7x TCs
            # Explicit so a v6e-tuned tile sweep can't silently blow the 64 MiB
            # physical / 32 MiB scoped VMEM on v7x; current tiles use ~1-2 MiB.
            vmem_limit_bytes=32 * 1024 * 1024,
        ),
        cost_estimate=pl.CostEstimate(
            flops=flops, transcendentals=0, bytes_accessed=bytes_accessed),
    )(x, w1_p, b1_p, w2_p, b2_p)

    return out[:B] if B_pad != B else out


def init_params(key):
    """PyTorch nn.Linear-style init: U[-1/sqrt(fan_in), 1/sqrt(fan_in)]."""
    k1, k2, k3, k4 = jax.random.split(key, 4)
    bound1 = 1.0 / jnp.sqrt(STATE_SIZE)
    bound2 = 1.0 / jnp.sqrt(HIDDEN)
    # Stored as [in, out] (transpose of PyTorch's [out, in]) so kernel does x @ W.
    w1 = jax.random.uniform(k1, (STATE_SIZE, HIDDEN), jnp.float32, -bound1, bound1)
    b1 = jax.random.uniform(k2, (HIDDEN,), jnp.float32, -bound1, bound1)
    w2 = jax.random.uniform(k3, (HIDDEN, ACTION_SIZE), jnp.float32, -bound2, bound2)
    b2 = jax.random.uniform(k4, (ACTION_SIZE,), jnp.float32, -bound2, bound2)
    return w1, b1, w2, b2


if __name__ == "__main__":
    key = jax.random.PRNGKey(0)
    k_params, k_x = jax.random.split(key)
    w1, b1, w2, b2 = init_params(k_params)

    # One-time weight preparation (outside the per-step forward).
    params = prepare_params(w1, b1, w2, b2)

    batch = 8
    x = jax.random.normal(k_x, (batch, STATE_SIZE), jnp.float32)

    out = qnetwork_forward(x, params)
    out = jax.block_until_ready(out)
    assert out.shape == (batch, ACTION_SIZE)

    # Reference with the same bf16-operand / f32-accumulate math (tight check).
    xb, w1b, w2b = (a.astype(jnp.bfloat16) for a in (x, w1, w2))
    h_ref = jnp.maximum(
        jnp.dot(xb, w1b, preferred_element_type=jnp.float32) + b1, 0.0)
    ref = jnp.dot(h_ref.astype(jnp.bfloat16), w2b,
                  preferred_element_type=jnp.float32) + b2
    assert jnp.allclose(out, ref, atol=1e-2, rtol=1e-2)

    # Loose sanity check against the pure-f32 forward (bf16 rounding tolerance).
    # TODO(synk): bf16 matmul operands deviate slightly from the f32 PyTorch
    # reference; acceptable for an RL Q-network, flip to f32 dots if not.
    ref_f32 = jnp.maximum(x @ w1 + b1, 0.0) @ w2 + b2
    assert jnp.allclose(out, ref_f32, atol=1e-1, rtol=1e-1)

    # Exercise a batch that doesn't divide the tile (row-padding + slice path).
    x2 = jax.random.normal(k_x, (13, STATE_SIZE), jnp.float32)
    out2 = jax.block_until_ready(qnetwork_forward(x2, params))
    ref2_f32 = jnp.maximum(x2 @ w1 + b1, 0.0) @ w2 + b2
    assert out2.shape == (13, ACTION_SIZE)
    assert jnp.allclose(out2, ref2_f32, atol=1e-1, rtol=1e-1)

    print("KERNEL_OK")
</pallas_src>

<mosaic_0001>
module attributes {stable_mosaic.version = 11 : i64} {
  func.func @qnet_kernel(%arg0: i32, %arg1: memref<8x64xf32, #tpu.memory_space<vmem>>, %arg2: memref<64x64xbf16, #tpu.memory_space<vmem>>, %arg3: memref<1x64xf32, #tpu.memory_space<vmem>>, %arg4: memref<64x4xbf16, #tpu.memory_space<vmem>>, %arg5: memref<1x4xf32, #tpu.memory_space<vmem>>, %arg6: memref<8x4xf32, #tpu.memory_space<vmem>>) attributes {dimension_semantics = [#tpu.dimension_semantics<parallel>], iteration_bounds = array<i64: 1>, scalar_prefetch = 0 : i64, scratch_operands = 0 : i64, tpu.core_type = #tpu.core_type<tc>, window_params = [{transform_indices = @transform_0, window_bounds = array<i64: 8, 64>}, {pipeline_mode = #tpu.pipeline_mode<synchronous>, transform_indices = @transform_1, window_bounds = array<i64: 64, 64>}, {pipeline_mode = #tpu.pipeline_mode<synchronous>, transform_indices = @transform_2, window_bounds = array<i64: 1, 64>}, {pipeline_mode = #tpu.pipeline_mode<synchronous>, transform_indices = @transform_3, window_bounds = array<i64: 64, 4>}, {pipeline_mode = #tpu.pipeline_mode<synchronous>, transform_indices = @transform_4, window_bounds = array<i64: 1, 4>}, {transform_indices = @transform_5, window_bounds = array<i64: 8, 4>}]} {
    %c0 = arith.constant 0 : index
    %c0_0 = arith.constant 0 : index
    %0 = vector.load %arg1[%c0, %c0_0] : memref<8x64xf32, #tpu.memory_space<vmem>>, vector<8x64xf32>
    %1 = arith.truncf %0 : vector<8x64xf32> to vector<8x64xbf16>
    %c0_1 = arith.constant 0 : index
    %c0_2 = arith.constant 0 : index
    %2 = vector.load %arg2[%c0_1, %c0_2] : memref<64x64xbf16, #tpu.memory_space<vmem>>, vector<64x64xbf16>
    %cst = arith.constant dense<0.000000e+00> : vector<8x64xf32>
    %3 = tpu.matmul %1, %2, %cst {dimension_numbers = #tpu.dot_dimension_numbers<[1], [0], [0], [1], [0, 0, 1, 1], [], []>} : vector<8x64xbf16>, vector<64x64xbf16>, vector<8x64xf32> -> vector<8x64xf32>
    %c0_3 = arith.constant 0 : index
    %c0_4 = arith.constant 0 : index
    %4 = vector.load %arg3[%c0_3, %c0_4] : memref<1x64xf32, #tpu.memory_space<vmem>>, vector<1x64xf32>
    %5 = vector.broadcast %4 : vector<1x64xf32> to vector<8x64xf32>
    %6 = arith.addf %3, %5 : vector<8x64xf32>
    %cst_5 = arith.constant 0.000000e+00 : f32
    %7 = vector.broadcast %cst_5 : f32 to vector<8x64xf32>
    %8 = arith.maximumf %6, %7 : vector<8x64xf32>
    %9 = arith.truncf %8 : vector<8x64xf32> to vector<8x64xbf16>
    %c0_6 = arith.constant 0 : index
    %c0_7 = arith.constant 0 : index
    %10 = vector.load %arg4[%c0_6, %c0_7] : memref<64x4xbf16, #tpu.memory_space<vmem>>, vector<64x4xbf16>
    %cst_8 = arith.constant dense<0.000000e+00> : vector<8x4xf32>
    %11 = tpu.matmul %9, %10, %cst_8 {dimension_numbers = #tpu.dot_dimension_numbers<[1], [0], [0], [1], [0, 0, 1, 1], [], []>} : vector<8x64xbf16>, vector<64x4xbf16>, vector<8x4xf32> -> vector<8x4xf32>
    %c0_9 = arith.constant 0 : index
    %c0_10 = arith.constant 0 : index
    %12 = vector.load %arg5[%c0_9, %c0_10] : memref<1x4xf32, #tpu.memory_space<vmem>>, vector<1x4xf32>
    %13 = vector.broadcast %12 : vector<1x4xf32> to vector<8x4xf32>
    %14 = arith.addf %11, %13 : vector<8x4xf32>
    %c0_11 = arith.constant 0 : index
    %c0_12 = arith.constant 0 : index
    %15 = vector.load %arg6[%c0_11, %c0_12] : memref<8x4xf32, #tpu.memory_space<vmem>>, vector<8x4xf32>
    tpu.vector_store %arg6[%c0_11, %c0_12], %14 {strides = array<i32>} : memref<8x4xf32, #tpu.memory_space<vmem>>, vector<8x4xf32>,
    return
  }
  func.func @transform_0(%arg0: i32) -> (i32, i32) {
    %c0_i32 = arith.constant 0 : i32
    %c0_i32_0 = arith.constant 0 : i32
    return %arg0, %c0_i32 : i32, i32
  }
  func.func @transform_1(%arg0: i32) -> (i32, i32) {
    %c0_i32 = arith.constant 0 : i32
    %c0_i32_0 = arith.constant 0 : i32
    %c0_i32_1 = arith.constant 0 : i32
    return %c0_i32, %c0_i32_0 : i32, i32
  }
  func.func @transform_2(%arg0: i32) -> (i32, i32) {
    %c0_i32 = arith.constant 0 : i32
    %c0_i32_0 = arith.constant 0 : i32
    %c0_i32_1 = arith.constant 0 : i32
    return %c0_i32, %c0_i32_0 : i32, i32
  }
  func.func @transform_3(%arg0: i32) -> (i32, i32) {
    %c0_i32 = arith.constant 0 : i32
    %c0_i32_0 = arith.constant 0 : i32
    %c0_i32_1 = arith.constant 0 : i32
    return %c0_i32, %c0_i32_0 : i32, i32
  }
  func.func @transform_4(%arg0: i32) -> (i32, i32) {
    %c0_i32 = arith.constant 0 : i32
    %c0_i32_0 = arith.constant 0 : i32
    %c0_i32_1 = arith.constant 0 : i32
    return %c0_i32, %c0_i32_0 : i32, i32
  }
  func.func @transform_5(%arg0: i32) -> (i32, i32) {
    %c0_i32 = arith.constant 0 : i32
    %c0_i32_0 = arith.constant 0 : i32
    return %arg0, %c0_i32 : i32, i32
  }
}

</mosaic_0001>

<llo_original>
// kernel: qnetwork_forward.1
$region0: #{qnetwork_forward.1}
  #allocation0 [shape = 'u32[]', space=smem, size = 0x4, offset = 0x4, fixed_abs, tag = 'smem constant byte address 0x4 - core index']
  #allocation1 [shape = 'u32[144,128]{1,0:T(1,128)}', space=vmem, size = 0x12000, scoped, tag = 'internal scratch']
  %s0 = inlined_call_operand.hbm [shape: f32[8,64], index: 0, kind: input, shape index: {}]
  %s1 = inlined_call_operand.vmem [shape: bf16[64,64], index: 1, kind: input, shape index: {}]
  %s2 = inlined_call_operand.vmem [shape: f32[1,64], index: 2, kind: input, shape index: {}]
  %s3 = inlined_call_operand.vmem [shape: bf16[64,4], index: 3, kind: input, shape index: {}]
  %s4 = inlined_call_operand.vmem [shape: f32[1,4], index: 4, kind: input, shape index: {}]
  %s5 = inlined_call_operand.vmem [shape: f32[8,4], index: 5, kind: output, shape index: {}]
  %s6 = sld [smem:[#allocation0]]
  $region34: #{qnetwork_forward.1} parent=0
    _
  %s8 = ssub.s32 1, %s6
  %s9 = scalar_select 0, %s8, %s6
  $region1: #{qnetwork_forward.1} parent=0
    #allocation2 [shape = 'u8[4096]{0}', space=vmem, size = 0x1000, scoped, tag = 'input window, operand 0, single buffered']
    #allocation3 [shape = 's32[1]{0}', space=sflag, size = 0x4, scoped, tag = 'scoped memory for qnetwork_forward.1']
    %10 = vsyncpa [#allocation3], 0
    // Predicated region
    $region2: #{qnetwork_forward.1} parent=1 // pred_check
      _
    $region3: #{qnetwork_forward.1} parent=1 // pred_check_branch
      %12 = sbr.rel (0) target = $region5
    $region4: #{qnetwork_forward.1} parent=1 // pred_region
      %s14 = ssub.s32 128, 128
      %15 = vsyncadd [#allocation3], %s14
      %s17 = sshll.u32 [#allocation2], 4
      %s18 = int_to_ptr.vmem [resolvable:$true] %s17
      %20 = dma.hbm_to_vmem [thread:$0]  %s0, 128, %s18, [#allocation3]
    $region5: #{qnetwork_forward.1} parent=1 // pred_fallthru
      _
    // Predicated region
    $region6: #{qnetwork_forward.1} parent=1 // pred_check
      _
    $region7: #{qnetwork_forward.1} parent=1 // pred_check_branch
      %22 = sbr.rel (0) target = $region9
    $region8: #{qnetwork_forward.1} parent=1 // pred_region
      _
    $region9: #{qnetwork_forward.1} parent=1 // pred_fallthru
      _
    // Predicated region
    $region10: #{qnetwork_forward.1} parent=1 // pred_check
      _
    $region11: #{qnetwork_forward.1} parent=1 // pred_check_branch
      %24 = sbr.rel (0) target = $region13
    $region12: #{qnetwork_forward.1} parent=1 // pred_region
      _
    $region13: #{qnetwork_forward.1} parent=1 // pred_fallthru
      _
    // Predicated region
    $region14: #{qnetwork_forward.1} parent=1 // pred_check
      _
    $region15: #{qnetwork_forward.1} parent=1 // pred_check_branch
      %26 = sbr.rel (0) target = $region17
    $region16: #{qnetwork_forward.1} parent=1 // pred_region
      _
    $region17: #{qnetwork_forward.1} parent=1 // pred_fallthru
      _
    // Predicated region
    $region18: #{qnetwork_forward.1} parent=1 // pred_check
      _
    $region19: #{qnetwork_forward.1} parent=1 // pred_check_branch
      %28 = sbr.rel (0) target = $region21
    $region20: #{qnetwork_forward.1} parent=1 // pred_region
      _
    $region21: #{qnetwork_forward.1} parent=1 // pred_fallthru
      _
    // Predicated region
    $region22: #{qnetwork_forward.1} parent=1 // pred_check
      _
    $region23: #{qnetwork_forward.1} parent=1 // pred_check_branch
      %30 = sbr.rel (0) target = $region25
    $region24: #{qnetwork_forward.1} parent=1 // pred_region
      %31 = dma.done [#allocation3], 128
    $region25: #{qnetwork_forward.1} parent=1 // pred_fallthru
      _
    %v33 = vld [vmem:[#allocation2] sm:$0xff]
    %v34 = vpack.c.bf16 %v33, %v33
    %v35 = vld [vmem:[%s1] sm:$0xf]
    %v36 = vld [vmem:[%s1 + $0x4] sm:$0xf]
    %v37 = vld [vmem:[%s1 + $0x8] sm:$0xf]
    %v38 = vld [vmem:[%s1 + $0xc] sm:$0xf]
    %v39 = vld [vmem:[%s1 + $0x10] sm:$0xf]
    %v40 = vld [vmem:[%s1 + $0x14] sm:$0xf]
    %v41 = vld [vmem:[%s1 + $0x18] sm:$0xf]
    %v42 = vld [vmem:[%s1 + $0x1c] sm:$0xf]
    %v43 = vld [vmem:[%s2] sm:$0x1]
    %v45 = vlaneseq
    %v46 = vshrl.u32 %v45, 7
    %v47 = vsub.s32 0, %v46
    %v48 = vrot.slane %v43, %v47
    %v58 = vunpack.c.l.b16 %v35
    %v59 = vunpack.c.l.b16 %v36
    %v60 = vunpack.c.l.b16 %v37
    %v61 = vunpack.c.l.b16 %v38
    %v62 = vunpack.c.l.b16 %v39
    %v63 = vunpack.c.l.b16 %v40
    %v64 = vunpack.c.l.b16 %v41
    %v65 = vunpack.c.l.b16 %v42
    %v66 = vpack.c.b16 %v59, %v58
    %v67 = vpack.c.b16 %v61, %v60
    %v68 = vpack.c.b16 %v63, %v62
    %v69 = vpack.c.b16 %v65, %v64
    %vm74 = vcmask 523264
    %v76 = vsel %vm74, %v34, 0
    %78 = vmatprep.subr.bf16.mxu0 0
    %79 = vmatpush1.bf16.msra.mxu0 %v66
    %80 = vmatprep.subr.bf16.mxu0 0
    %81 = vmatpush1.bf16.msra.mxu0 %v67
    %82 = vmatprep.subr.bf16.mxu0 0
    %83 = vmatpush1.bf16.msra.mxu0 %v68
    %84 = vmatprep.subr.bf16.mxu0 0
    %85 = vmatpush1.bf16.msra.mxu0 %v69
    %86 = vmatprep.subr.bf16.mxu0 0
    %87 = vmatpush1.bf16.msra.mxu0 0
    %88 = vmatprep.subr.bf16.mxu0 0
    %89 = vmatpush1.bf16.msra.mxu0 0
    %90 = vmatprep.subr.bf16.mxu0 0
    %91 = vmatpush1.bf16.msra.mxu0 0
    %92 = vmatprep.subr.bf16.mxu0 0
    %93 = vmatpush1.bf16.msra.mxu0 0
    %94 = vmatprep.subr.bf16.mxu0 0
    %95 = vmatpush1.bf16.msra.mxu0 0
    %96 = vmatprep.subr.bf16.mxu0 0
    %97 = vmatpush1.bf16.msra.mxu0 0
    %98 = vmatprep.subr.bf16.mxu0 0
    %99 = vmatpush1.bf16.msra.mxu0 0
    %100 = vmatprep.subr.bf16.mxu0 0
    %101 = vmatpush1.bf16.msra.mxu0 0
    %102 = vmatprep.subr.bf16.mxu0 0
    %103 = vmatpush1.bf16.msra.mxu0 0
    %104 = vmatprep.subr.bf16.mxu0 0
    %105 = vmatpush1.bf16.msra.mxu0 0
    %106 = vmatprep.subr.bf16.mxu0 0
    %107 = vmatpush1.bf16.msra.mxu0 0
    %108 = vmatprep.subr.bf16.mxu0 0
    %109 = vmatpush1.bf16.msra.mxu0 0
    %110 = vmatprep.mubr.bf16.mxu0 0
    %111 = vmatmul.mubr.bf16.gmra.mrb[0].mxu0 %v76
    %v112 = vpop.f32.mrb[0].mxu0
    %v113 = vadd.f32 %v48, %v112
    %v114 = vpop.f32.mrb[0].mxu0
    %v115 = vpop.f32.mrb[0].mxu0
    %v116 = vpop.f32.mrb[0].mxu0
    %117 = vdwg.mxu0
    %v118 = vmax.f32 %v113, 0.0
    %v119 = vpack.c.bf16 %v118, %v118
    %v120 = vld [vmem:[%s3] sm:$0xf]
    %v121 = vld [vmem:[%s3 + $0x4] sm:$0xf]
    %v122 = vld [vmem:[%s3 + $0x8] sm:$0xf]
    %v123 = vld [vmem:[%s3 + $0xc] sm:$0xf]
    %v124 = vld [vmem:[%s3 + $0x10] sm:$0xf]
    %v125 = vld [vmem:[%s3 + $0x14] sm:$0xf]
    %v126 = vld [vmem:[%s3 + $0x18] sm:$0xf]
    %v127 = vld [vmem:[%s3 + $0x1c] sm:$0xf]
    %v128 = vld [vmem:[%s4] sm:$0x1]
    %v130 = vlaneseq
    %v131 = vshrl.u32 %v130, 7
    %v132 = vsub.s32 0, %v131
    %v133 = vrot.slane %v128, %v132
    %v143 = vunpack.c.l.b16 %v120
    %v144 = vunpack.c.l.b16 %v121
    %v145 = vunpack.c.l.b16 %v122
    %v146 = vunpack.c.l.b16 %v123
    %v147 = vunpack.c.l.b16 %v124
    %v148 = vunpack.c.l.b16 %v125
    %v149 = vunpack.c.l.b16 %v126
    %v150 = vunpack.c.l.b16 %v127
    %v151 = vpack.c.b16 %v144, %v143
    %v152 = vpack.c.b16 %v146, %v145
    %v153 = vpack.c.b16 %v148, %v147
    %v154 = vpack.c.b16 %v150, %v149
    %v160 = vsel %vm74, %v119, 0
    %162 = vmatprep.subr.bf16.mxu0 0
    %163 = vmatpush1.bf16.msra.mxu0 %v151
    %164 = vmatprep.subr.bf16.mxu0 0
    %165 = vmatpush1.bf16.msra.mxu0 %v152
    %166 = vmatprep.subr.bf16.mxu0 0
    %167 = vmatpush1.bf16.msra.mxu0 %v153
    %168 = vmatprep.subr.bf16.mxu0 0
    %169 = vmatpush1.bf16.msra.mxu0 %v154
    %170 = vmatprep.subr.bf16.mxu0 0
    %171 = vmatpush1.bf16.msra.mxu0 0
    %172 = vmatprep.subr.bf16.mxu0 0
    %173 = vmatpush1.bf16.msra.mxu0 0
    %174 = vmatprep.subr.bf16.mxu0 0
    %175 = vmatpush1.bf16.msra.mxu0 0
    %176 = vmatprep.subr.bf16.mxu0 0
    %177 = vmatpush1.bf16.msra.mxu0 0
    %178 = vmatprep.subr.bf16.mxu0 0
    %179 = vmatpush1.bf16.msra.mxu0 0
    %180 = vmatprep.subr.bf16.mxu0 0
    %181 = vmatpush1.bf16.msra.mxu0 0
    %182 = vmatprep.subr.bf16.mxu0 0
    %183 = vmatpush1.bf16.msra.mxu0 0
    %184 = vmatprep.subr.bf16.mxu0 0
    %185 = vmatpush1.bf16.msra.mxu0 0
    %186 = vmatprep.subr.bf16.mxu0 0
    %187 = vmatpush1.bf16.msra.mxu0 0
    %188 = vmatprep.subr.bf16.mxu0 0
    %189 = vmatpush1.bf16.msra.mxu0 0
    %190 = vmatprep.subr.bf16.mxu0 0
    %191 = vmatpush1.bf16.msra.mxu0 0
    %192 = vmatprep.subr.bf16.mxu0 0
    %193 = vmatpush1.bf16.msra.mxu0 0
    %194 = vmatprep.mubr.bf16.mxu0 0
    %195 = vmatmul.mubr.bf16.gmra.mrb[0].mxu0 %v160
    %v196 = vpop.f32.mrb[0].mxu0
    %v197 = vadd.f32 %v133, %v196
    %v198 = vpop.f32.mrb[0].mxu0
    %v199 = vpop.f32.mrb[0].mxu0
    %v200 = vpop.f32.mrb[0].mxu0
    %201 = vdwg.mxu0
    %vm202 = vcmask 31744
    %203 = vst.msk [vmem:[%s5] sm:$0xff] %vm202, %v197
    // Predicated region
    $region26: #{qnetwork_forward.1} parent=1 // pred_check
      _
    $region27: #{qnetwork_forward.1} parent=1 // pred_check_branch
      %205 = sbr.rel (0) target = $region29
    $region28: #{qnetwork_forward.1} parent=1 // pred_region
      _
    $region29: #{qnetwork_forward.1} parent=1 // pred_fallthru
      _
    // Predicated region
    $region30: #{qnetwork_forward.1} parent=1 // pred_check
      _
    $region31: #{qnetwork_forward.1} parent=1 // pred_check_branch
      %207 = sbr.rel (0) target = $region33
    $region32: #{qnetwork_forward.1} parent=1 // pred_region
      _
    $region33: #{qnetwork_forward.1} parent=1 // pred_fallthru
      _
    %208 = vsyncpa [#allocation3], 1

</llo_original>
